<compile_context>
chip_gen: v5e
topology: v5e:2x2
jax: 0.10.0
libtpu: 0.0.40
codegen_flags: <defaults>
</compile_context>

<pallas_src>
import functools

import jax
import jax.numpy as jnp
import numpy as np
from jax import lax
from jax.experimental import pallas as pl
from jax.experimental.pallas import tpu as pltpu

_VMEM_LIMIT_BYTES = 48 << 20   # v7x-safe cap; also overrides v5e's 16 MiB default
_VMEM_HEADROOM = 2 << 20


def _round_up(x, m):
    return (x + m - 1) // m * m


# ----------------------------- single-pass kernel ---------------------------

def _adain_kernel(x_ref, wb_ref, o_ref, *, eps, r_blk, gran):
    # x_ref: (r_blk, HW)   wb_ref: (R_pad, 2) resident   o_ref: (r_blk, HW)
    r = pl.program_id(0)
    x = x_ref[...].astype(jnp.float32)
    mean = jnp.mean(x, axis=-1, keepdims=True)            # per-(b,c) spatial mean
    xc = x - mean
    var = jnp.mean(xc * xc, axis=-1, keepdims=True)        # biased var (F.batch_norm)
    start = pl.multiple_of(r * r_blk, gran)
    wb = wb_ref[pl.ds(start, r_blk), :]                     # (r_blk, 2) f32
    scale = wb[:, 0:1] * lax.rsqrt(var + eps)
    shift = wb[:, 1:2]
    o_ref[...] = (xc * scale + shift).astype(o_ref.dtype)


# ------------------------- two-pass kernel (huge H*W) ------------------------

def _adain_twopass_kernel(x_ref, wb_ref, o_ref, sum_ref, sq_ref, *,
                          eps, inv_n, r_blk, gran):
    # grid = (rows, phase, hw):  phase 0 accumulates, phase 1 normalizes.
    r = pl.program_id(0)
    phase = pl.program_id(1)
    hw = pl.program_id(2)

    @pl.when((phase == 0) & (hw == 0))
    def _():
        sum_ref[...] = jnp.zeros_like(sum_ref)
        sq_ref[...] = jnp.zeros_like(sq_ref)

    @pl.when(phase == 0)
    def _():
        x = x_ref[...].astype(jnp.float32)
        sum_ref[...] += jnp.sum(x, axis=-1, keepdims=True)
        sq_ref[...] += jnp.sum(x * x, axis=-1, keepdims=True)

    @pl.when(phase == 1)
    def _():
        x = x_ref[...].astype(jnp.float32)
        mean = sum_ref[...] * inv_n
        var = jnp.maximum(sq_ref[...] * inv_n - mean * mean, 0.0)
        start = pl.multiple_of(r * r_blk, gran)
        wb = wb_ref[pl.ds(start, r_blk), :]                 # (r_blk, 2) f32
        scale = wb[:, 0:1] * lax.rsqrt(var + eps)
        shift = wb[:, 1:2]
        o_ref[...] = ((x - mean) * scale + shift).astype(o_ref.dtype)


# --------------------------------- wrapper -----------------------------------

def adaptive_instance_norm_2d(x, weight, bias, eps=1e-5):
    """x: (B, C, H, W). weight, bias: (B*C,) AdaIN affine params."""
    B, C, H, W = x.shape
    R, HW = B * C, H * W
    itemsize = jnp.dtype(x.dtype).itemsize
    gran = max(8, 32 // itemsize)                  # 8 for f32, 16 for bf16, 32 for int8

    x2 = x.reshape(R, HW)
    wb = jnp.stack([weight.astype(jnp.float32),
                    bias.astype(jnp.float32)], axis=-1)     # (R, 2), kept resident

    R_pad = _round_up(R, gran)
    if R_pad != R:
        x2 = jnp.pad(x2, ((0, R_pad - R), (0, 0)))
        wb = jnp.pad(wb, ((0, R_pad - R), (0, 0)))

    # ---- VMEM plan: ~4 live tiles (2 in + 2 out) + resident wb + headroom ----
    wb_bytes = R_pad * 512                         # (R_pad, 2) f32 lane-padded in VMEM
    tile_budget = (_VMEM_LIMIT_BYTES - _VMEM_HEADROOM - wb_bytes) // 4
    hw_lanes = _round_up(HW, 128)
    row_bytes = hw_lanes * itemsize
    tile_budget = max(tile_budget, gran * 128 * itemsize)

    if gran * row_bytes <= tile_budget:
        # ------------------------- single-pass path --------------------------
        r_blk = max(gran, min(R_pad, (tile_budget // row_bytes) // gran * gran))
        # v7x megacore: prefer >= 2 grid steps along the parallel axis.
        while R_pad // r_blk < 2 and r_blk > gran:
            r_blk = max(gran, (r_blk // 2) // gran * gran)
        R_fin = _round_up(R_pad, r_blk)
        if R_fin != R_pad:
            x2 = jnp.pad(x2, ((0, R_fin - R_pad), (0, 0)))
            wb = jnp.pad(wb, ((0, R_fin - R_pad), (0, 0)))
            R_pad = R_fin
        n_r = R_pad // r_blk

        x_spec = pl.BlockSpec((r_blk, HW), lambda r: (r, 0))
        # Triple-buffer x only when there are many short steps and VMEM headroom.
        if (n_r >= 4 and
                5 * r_blk * row_bytes + wb_bytes + _VMEM_HEADROOM <= _VMEM_LIMIT_BYTES):
            x_spec = pl.BlockSpec((r_blk, HW), lambda r: (r, 0),
                                  pipeline_mode=pl.Buffered(3))

        out2 = pl.pallas_call(
            functools.partial(_adain_kernel, eps=eps, r_blk=r_blk, gran=gran),
            out_shape=jax.ShapeDtypeStruct((R_pad, HW), x.dtype),
            grid=(n_r,),
            in_specs=[x_spec,
                      pl.BlockSpec((R_pad, 2), lambda r: (0, 0))],   # resident wb
            out_specs=pl.BlockSpec((r_blk, HW), lambda r: (r, 0)),
            compiler_params=pltpu.CompilerParams(
                dimension_semantics=("parallel",),
                vmem_limit_bytes=_VMEM_LIMIT_BYTES),
        )(x2, wb)
        out2 = out2[:R]
    else:
        # -------------- two-pass path: split H*W (very large maps) -----------
        r_blk = gran
        hw_blk = max(128, (tile_budget // (r_blk * itemsize)) // 128 * 128)
        hw_blk = min(hw_blk, hw_lanes)
        HW_pad = _round_up(HW, hw_blk)
        if HW_pad != HW:
            x2 = jnp.pad(x2, ((0, 0), (0, HW_pad - HW)))   # zero pad: exact sums
        n_hw = HW_pad // hw_blk
        n_r = R_pad // r_blk

        out2 = pl.pallas_call(
            functools.partial(_adain_twopass_kernel, eps=eps, inv_n=1.0 / HW,
                              r_blk=r_blk, gran=gran),
            out_shape=jax.ShapeDtypeStruct((R_pad, HW_pad), x.dtype),
            grid=(n_r, 2, n_hw),
            in_specs=[pl.BlockSpec((r_blk, hw_blk), lambda r, p, h: (r, h)),
                      pl.BlockSpec((R_pad, 2), lambda r, p, h: (0, 0))],
            out_specs=pl.BlockSpec((r_blk, hw_blk), lambda r, p, h: (r, h * p)),
            scratch_shapes=[pltpu.VMEM((r_blk, 1), jnp.float32),
                            pltpu.VMEM((r_blk, 1), jnp.float32)],
            compiler_params=pltpu.CompilerParams(
                dimension_semantics=("parallel", "arbitrary", "arbitrary"),
                vmem_limit_bytes=_VMEM_LIMIT_BYTES),
        )(x2, wb)
        out2 = out2[:R, :HW]

    # TODO(synk): the training-mode running_mean/running_var buffer update is a
    # module side effect and is not materialized; it does not affect the output.
    return out2.reshape(B, C, H, W)


def _reference(x, weight, bias, eps=1e-5):
    """Pure-JAX reference matching the PyTorch forward."""
    B, C, H, W = x.shape
    xr = x.reshape(B, C, H * W).astype(jnp.float32)
    mean = xr.mean(axis=-1, keepdims=True)
    var = ((xr - mean) ** 2).mean(axis=-1, keepdims=True)
    w = weight.reshape(B, C, 1).astype(jnp.float32)
    b = bias.reshape(B, C, 1).astype(jnp.float32)
    out = (xr - mean) * lax.rsqrt(var + eps) * w + b
    return out.reshape(B, C, H, W).astype(x.dtype)


if __name__ == "__main__":
    B, C, H, W = 2, 4, 16, 16                      # H*W = 256 -> lane-dense
    key = jax.random.PRNGKey(0)
    kx, kw, kb = jax.random.split(key, 3)
    x = jax.random.normal(kx, (B, C, H, W), jnp.float32)   # NCHW like PyTorch
    # AdaIN params are assigned per (batch, channel) pair, i.e. shape (B*C,).
    weight = jax.random.normal(kw, (B * C,), jnp.float32) + 1.0
    bias = jax.random.normal(kb, (B * C,), jnp.float32)

    out = jax.block_until_ready(adaptive_instance_norm_2d(x, weight, bias))
    ref = jax.block_until_ready(_reference(x, weight, bias))

    assert out.shape == (B, C, H, W), out.shape
    np.testing.assert_allclose(np.asarray(out), np.asarray(ref),
                               rtol=1e-5, atol=1e-5)
    print("KERNEL_OK")
</pallas_src>

<mosaic_0001>
module attributes {stable_mosaic.version = 11 : i64} {
  func.func @_adain_kernel(%arg0: i32, %arg1: memref<8x256xf32, #tpu.memory_space<vmem>>, %arg2: memref<8x2xf32, #tpu.memory_space<vmem>>, %arg3: memref<8x256xf32, #tpu.memory_space<vmem>>) attributes {dimension_semantics = [#tpu.dimension_semantics<parallel>], iteration_bounds = array<i64: 1>, scalar_prefetch = 0 : i64, scratch_operands = 0 : i64, tpu.core_type = #tpu.core_type<tc>, window_params = [{transform_indices = @transform_0, window_bounds = array<i64: 8, 256>}, {pipeline_mode = #tpu.pipeline_mode<synchronous>, transform_indices = @transform_1, window_bounds = array<i64: 8, 2>}, {transform_indices = @transform_2, window_bounds = array<i64: 8, 256>}]} {
    %c0 = arith.constant 0 : index
    %c0_0 = arith.constant 0 : index
    %0 = vector.load %arg1[%c0, %c0_0] : memref<8x256xf32, #tpu.memory_space<vmem>>, vector<8x256xf32>
    %cst = arith.constant dense<0.000000e+00> : vector<8xf32>
    %1 = vector.multi_reduction <add>, %0, %cst [1] : vector<8x256xf32> to vector<8xf32>
    %2 = vector.shape_cast %1 : vector<8xf32> to vector<8x1xf32>
    %cst_1 = arith.constant 2.560000e+02 : f32
    %3 = vector.broadcast %cst_1 : f32 to vector<8x1xf32>
    %4 = arith.divf %2, %3 : vector<8x1xf32>
    %5 = vector.broadcast %4 : vector<8x1xf32> to vector<8x256xf32>
    %6 = arith.subf %0, %5 : vector<8x256xf32>
    %7 = arith.mulf %6, %6 : vector<8x256xf32>
    %cst_2 = arith.constant dense<0.000000e+00> : vector<8xf32>
    %8 = vector.multi_reduction <add>, %7, %cst_2 [1] : vector<8x256xf32> to vector<8xf32>
    %9 = vector.shape_cast %8 : vector<8xf32> to vector<8x1xf32>
    %cst_3 = arith.constant 2.560000e+02 : f32
    %10 = vector.broadcast %cst_3 : f32 to vector<8x1xf32>
    %11 = arith.divf %9, %10 : vector<8x1xf32>
    %c8_i32 = arith.constant 8 : i32
    %12 = arith.muli %arg0, %c8_i32 : i32
    %13 = tpu.assume_multiple %12, 8 : i32
    %14 = arith.index_cast %13 : i32 to index
    %c0_4 = arith.constant 0 : index
    %15 = vector.load %arg2[%14, %c0_4] : memref<8x2xf32, #tpu.memory_space<vmem>>, vector<8x2xf32>
    %16 = vector.extract_strided_slice %15 {offsets = [0, 0], sizes = [8, 1], strides = [1, 1]} : vector<8x2xf32> to vector<8x1xf32>
    %cst_5 = arith.constant 9.99999974E-6 : f32
    %17 = vector.broadcast %cst_5 : f32 to vector<8x1xf32>
    %18 = arith.addf %11, %17 : vector<8x1xf32>
    %19 = math.rsqrt %18 : vector<8x1xf32>
    %20 = arith.mulf %16, %19 : vector<8x1xf32>
    %21 = vector.extract_strided_slice %15 {offsets = [0, 1], sizes = [8, 1], strides = [1, 1]} : vector<8x2xf32> to vector<8x1xf32>
    %22 = vector.broadcast %20 : vector<8x1xf32> to vector<8x256xf32>
    %23 = arith.mulf %6, %22 : vector<8x256xf32>
    %24 = vector.broadcast %21 : vector<8x1xf32> to vector<8x256xf32>
    %25 = arith.addf %23, %24 : vector<8x256xf32>
    %c0_6 = arith.constant 0 : index
    %c0_7 = arith.constant 0 : index
    %26 = vector.load %arg3[%c0_6, %c0_7] : memref<8x256xf32, #tpu.memory_space<vmem>>, vector<8x256xf32>
    tpu.vector_store %arg3[%c0_6, %c0_7], %25 {strides = array<i32>} : memref<8x256xf32, #tpu.memory_space<vmem>>, vector<8x256xf32>,
    return
  }
  func.func @transform_0(%arg0: i32) -> (i32, i32) {
    %c0_i32 = arith.constant 0 : i32
    %c0_i32_0 = arith.constant 0 : i32
    return %arg0, %c0_i32 : i32, i32
  }
  func.func @transform_1(%arg0: i32) -> (i32, i32) {
    %c0_i32 = arith.constant 0 : i32
    %c0_i32_0 = arith.constant 0 : i32
    %c0_i32_1 = arith.constant 0 : i32
    return %c0_i32, %c0_i32_0 : i32, i32
  }
  func.func @transform_2(%arg0: i32) -> (i32, i32) {
    %c0_i32 = arith.constant 0 : i32
    %c0_i32_0 = arith.constant 0 : i32
    return %arg0, %c0_i32 : i32, i32
  }
}

</mosaic_0001>

<llo_original>
// kernel: tpu_custom_call.1
$region0: #{tpu_custom_call.1}
  #allocation0 [shape = 'u32[]', space=smem, size = 0x4, offset = 0x4, fixed_abs, tag = 'smem constant byte address 0x4 - core index']
  #allocation1 [shape = 'u32[72,128]{1,0:T(1,128)}', space=vmem, size = 0x9000, scoped, tag = 'internal scratch']
  %s0 = inlined_call_operand.hbm [shape: f32[8,256], index: 0, kind: input, shape index: {}]
  %s1 = inlined_call_operand.vmem [shape: f32[8,2], index: 1, kind: input, shape index: {}]
  %s2 = inlined_call_operand.hbm [shape: f32[8,256], index: 2, kind: output, shape index: {}]
  %s3 = sld [smem:[#allocation0]]
  $region22: #{tpu_custom_call.1} parent=0
    _
  %s5 = ssub.s32 1, %s3
  %s6 = scalar_select 0, %s5, %s3
  $region1: #{tpu_custom_call.1} parent=0
    #allocation2 [shape = 'u8[8192]{0}', space=vmem, size = 0x2000, scoped, tag = 'input window, operand 0, single buffered']
    #allocation3 [shape = 's32[1]{0}', space=sflag, size = 0x4, scoped, tag = 'scoped memory for tpu_custom_call.1']
    #allocation4 [shape = 's32[1]{0}', space=sflag, size = 0x4, scoped, tag = 'scoped memory for tpu_custom_call.1']
    #allocation5 [shape = 'u8[8192]{0}', space=vmem, size = 0x2000, scoped, tag = 'output window, operand 0, single buffered']
    %7 = vsyncpa [#allocation3], 0
    %8 = vsyncpa [#allocation4], 0
    // Predicated region
    $region2: #{tpu_custom_call.1} parent=1 // pred_check
      _
    $region3: #{tpu_custom_call.1} parent=1 // pred_check_branch
      %10 = sbr.rel (0) target = $region5
    $region4: #{tpu_custom_call.1} parent=1 // pred_region
      %12 = vsyncadd [#allocation3], 0
      %s14 = sshll.u32 %s0, 4
      %s15 = int_to_ptr.hbm [resolvable:$true] %s14
      %s16 = sshll.u32 [#allocation2], 4
      %s17 = int_to_ptr.vmem [resolvable:$true] %s16
      %19 = dma.hbm_to_vmem [thread:$0]  %s15, 256, %s17, [#allocation3]
    $region5: #{tpu_custom_call.1} parent=1 // pred_fallthru
      _
    // Predicated region
    $region6: #{tpu_custom_call.1} parent=1 // pred_check
      _
    $region7: #{tpu_custom_call.1} parent=1 // pred_check_branch
      %21 = sbr.rel (0) target = $region9
    $region8: #{tpu_custom_call.1} parent=1 // pred_region
      _
    $region9: #{tpu_custom_call.1} parent=1 // pred_fallthru
      _
    // Predicated region
    $region10: #{tpu_custom_call.1} parent=1 // pred_check
      _
    $region11: #{tpu_custom_call.1} parent=1 // pred_check_branch
      %23 = sbr.rel (0) target = $region13
    $region12: #{tpu_custom_call.1} parent=1 // pred_region
      %25 = dma.done [#allocation3], 256
    $region13: #{tpu_custom_call.1} parent=1 // pred_fallthru
      _
    %v26 = vld [vmem:[#allocation2] sm:$0xff]
    %v27 = vld [vmem:[#allocation2 + $0x8] sm:$0xff]
    %v28 = vadd.f32 %v26, %v27
    %29 = vadd.xlane.f32.xlu0 %v28
    %v30 = vpop.xlane.xlu0 %29
    %v31 = vrcp.pop 256.0
    %v32 = vmul.f32 256.0, %v31
    %v33 = vsub.f32 1.0, %v32
    %v34 = vmul.f32 %v31, %v33
    %v35 = vadd.f32 %v31, %v34
    %vm36 = vweird.f32 %v31
    %v37 = vsel %vm36, %v31, %v35
    %v38 = vmul.f32 %v30, %v37
    %v39 = vsub.f32 %v26, %v38
    %v40 = vsub.f32 %v27, %v38
    %v41 = vmul.f32 %v39, %v39
    %v42 = vmul.f32 %v40, %v40
    %v43 = vadd.f32 %v41, %v42
    %44 = vadd.xlane.f32.xlu0 %v43
    %v45 = vpop.xlane.xlu0 %44
    %v46 = vmul.f32 %v45, %v37
    %s47 = smul.u32 0, 8
    %s48 = scalar_lea.vmem %s1, %s47
    %v49 = vld [vmem:[%s48] sm:$0xff]
    %v50 = vadd.f32 %v46, 1e-05
    %v51 = vrsqrt.pop %v50
    %v52 = vmul.f32 %v51, %v50
    %v53 = vmul.f32 %v52, %v51
    %v54 = vmul.f32 0.5, %v53
    %v55 = vsub.f32 1.5, %v54
    %v56 = vmul.f32 %v51, %v55
    %vm57 = vweird.f32 %v50
    %vm58 = vweird.f32 %v51
    %vm59 = vmor %vm57, %vm58
    %v60 = vsel %vm59, %v51, %v56
    %v61 = vmul.f32 %v49, %v60
    %63 = vset.pattern.permute.xlu0 0
    %64 = vperm.xlu0 %63, %v61
    %v65 = vpop.permute.xlu0 %64
    %v67 = vmul.f32 %v39, %v65
    %v68 = vmul.f32 %v40, %v65
    %70 = vset.pattern.permute.xlu0 1
    %71 = vperm.xlu0 %70, %v49
    %v72 = vpop.permute.xlu0 %71
    %v74 = vadd.f32 %v67, %v72
    %v75 = vadd.f32 %v68, %v72
    %76 = vst [vmem:[#allocation5] sm:$0xff] %v74
    %77 = vst [vmem:[#allocation5 + $0x8] sm:$0xff] %v75
    // Predicated region
    $region14: #{tpu_custom_call.1} parent=1 // pred_check
      _
    $region15: #{tpu_custom_call.1} parent=1 // pred_check_branch
      %79 = sbr.rel (0) target = $region17
    $region16: #{tpu_custom_call.1} parent=1 // pred_region
      %81 = vsyncadd [#allocation4], 0
      %s83 = sshll.u32 [#allocation5], 4
      %s84 = int_to_ptr.vmem [resolvable:$true] %s83
      %s85 = sshll.u32 %s2, 4
      %s86 = int_to_ptr.hbm [resolvable:$true] %s85
      %88 = dma.vmem_to_hbm [thread:$0]  %s84, 256, %s86, [#allocation4]
    $region17: #{tpu_custom_call.1} parent=1 // pred_fallthru
      _
    // Predicated region
    $region18: #{tpu_custom_call.1} parent=1 // pred_check
      _
    $region19: #{tpu_custom_call.1} parent=1 // pred_check_branch
      %90 = sbr.rel (0) target = $region21
    $region20: #{tpu_custom_call.1} parent=1 // pred_region
      %92 = dma.done [#allocation4], 256
    $region21: #{tpu_custom_call.1} parent=1 // pred_fallthru
      _
    %93 = vsyncpa [#allocation3], 1
    %94 = vsyncpa [#allocation4], 1

</llo_original>
